<compile_context>
chip_gen: v7x
topology: tpu7x:2x2x1
jax: 0.10.0
libtpu: 0.0.40
codegen_flags: <defaults>
</compile_context>

<pallas_src>
import functools

import jax
import jax.numpy as jnp
from jax import lax
from jax.experimental import pallas as pl
from jax.experimental.pallas import tpu as pltpu


def _rup(x, m):
    return ((x + m - 1) // m) * m


# ----------------------------------------------------------------------------
# Kernel: fused twin-tower MLP over one block-diagonal bf16 parameter slab.
#   x_ref : (tb, d_in_pad) f32   batch-row tile
#   p_ref : (P, w_slab)    bf16  packed parameters
#   q_ref : (2, tb)        f32   transposed output (row 0 = q1, row 1 = q2)
# ----------------------------------------------------------------------------
def critic_fused_kernel(x_ref, p_ref, q_ref, *, hidden_layout, ro_w_off, ro_b_off):
    h = x_ref[...].astype(jnp.float32)
    for (w_off, w_rows, b_off) in hidden_layout:
        w = p_ref[w_off:w_off + w_rows, :]                        # bf16 (w_rows, w_slab)
        b = p_ref[b_off:b_off + 1, :].astype(jnp.float32)         # f32  (1, w_slab)
        z = jnp.dot(h.astype(jnp.bfloat16), w,
                    preferred_element_type=jnp.float32)           # [R6] bf16 MXU, f32 acc
        h = jnp.maximum(z + b, 0.0)                               # bias + ReLU in f32

    # [R3] Readout computed transposed: contract last dims (NT matmul) so the
    # result has batch along lanes -> narrow lane-dense output store.
    wro = p_ref[ro_w_off:ro_w_off + 16, :]                        # bf16 (16, w_slab); rows>=2 are zero
    bro = p_ref[ro_b_off:ro_b_off + 2, 0:1].astype(jnp.float32)   # f32  (2, 1)
    qt = lax.dot_general(
        wro, h.astype(jnp.bfloat16),
        dimension_numbers=(((1,), (1,)), ((), ())),
        preferred_element_type=jnp.float32)                       # (16, tb)
    q_ref[...] = (qt[0:2, :] + bro).astype(q_ref.dtype)


# ----------------------------------------------------------------------------
# Parameter init (mimics torch.nn.Linear default U(-1/sqrt(fan_in), 1/sqrt(fan_in)))
# Weights stored transposed: (in_features, out_features); biases (1, out).
# ----------------------------------------------------------------------------
def init_params(key, observation_dim, action_dim, hidden_dims):
    input_dim = observation_dim + action_dim
    sizes = [input_dim] + list(hidden_dims)
    n = len(hidden_dims)

    def linear(k, fan_in, fan_out):
        kw, kb = jax.random.split(k)
        bound = 1.0 / jnp.sqrt(jnp.float32(fan_in))
        w = jax.random.uniform(kw, (fan_in, fan_out), jnp.float32, -bound, bound)
        b = jax.random.uniform(kb, (1, fan_out), jnp.float32, -bound, bound)
        return w, b

    keys = jax.random.split(key, 2 * n + 2)
    params = {"W1": [], "b1": [], "W2": [], "b2": []}
    for l in range(n):
        w, b = linear(keys[l], sizes[l], sizes[l + 1])
        params["W1"].append(w); params["b1"].append(b)
    for l in range(n):
        w, b = linear(keys[n + l], sizes[l], sizes[l + 1])
        params["W2"].append(w); params["b2"].append(b)
    params["Wr1"], params["br1"] = linear(keys[2 * n], hidden_dims[-1], 1)
    params["Wr2"], params["br2"] = linear(keys[2 * n + 1], hidden_dims[-1], 1)
    return params


# ----------------------------------------------------------------------------
# Pack both towers into ONE block-diagonal, lane-padded bf16 parameter slab.
# Row offsets are 16-aligned so every weight block lands on a bf16 sublane tile.
# ----------------------------------------------------------------------------
def pack_critic_params(params, input_dim, hidden_dims):
    H = list(hidden_dims)
    w_slab = max(128, _rup(2 * max(H), 128))   # fused hidden width, 128-lane padded
    d_in_pad = _rup(input_dim, 8)

    blocks = []
    hidden_layout = []
    row = 0

    def add_block(arr):
        nonlocal row
        off = row
        blocks.append((off, arr))
        row += _rup(arr.shape[0], 16)          # bf16 sublane-tile alignment
        return off

    in_dims = [input_dim] + H[:-1]
    for l, (din, h) in enumerate(zip(in_dims, H)):
        wa, wb = params["W1"][l], params["W2"][l]
        ba, bb = params["b1"][l], params["b2"][l]
        if l == 0:
            w_rows = d_in_pad
            fw = jnp.zeros((w_rows, w_slab), jnp.float32)
            fw = fw.at[:din, :h].set(wa)
            fw = fw.at[:din, h:2 * h].set(wb)
        else:
            hp = H[l - 1]
            w_rows = w_slab
            fw = jnp.zeros((w_rows, w_slab), jnp.float32)
            fw = fw.at[:hp, :h].set(wa)
            fw = fw.at[hp:2 * hp, h:2 * h].set(wb)
        fb = jnp.zeros((1, w_slab), jnp.float32)
        fb = fb.at[:, :h].set(ba)
        fb = fb.at[:, h:2 * h].set(bb)
        w_off = add_block(fw)
        b_off = add_block(fb)
        hidden_layout.append((w_off, w_rows, b_off))

    hlast = H[-1]
    # Readout stored TRANSPOSED: row 0 = Wr1^T (cols 0:hlast), row 1 = Wr2^T (cols hlast:2*hlast).
    fwr = jnp.zeros((16, w_slab), jnp.float32)
    fwr = fwr.at[0, :hlast].set(params["Wr1"][:, 0])
    fwr = fwr.at[1, hlast:2 * hlast].set(params["Wr2"][:, 0])
    fbr = jnp.zeros((2, w_slab), jnp.float32)
    fbr = fbr.at[0, 0].set(params["br1"][0, 0])
    fbr = fbr.at[1, 0].set(params["br2"][0, 0])
    ro_w_off = add_block(fwr)
    ro_b_off = add_block(fbr)

    slab = jnp.zeros((row, w_slab), jnp.float32)
    for off, arr in blocks:
        slab = slab.at[off:off + arr.shape[0], :arr.shape[1]].set(arr)
    slab = slab.astype(jnp.bfloat16)           # [R6] bf16 params, f32 accumulation in-kernel

    plan = {"hidden_layout": tuple(hidden_layout),
            "ro_w_off": ro_w_off, "ro_b_off": ro_b_off,
            "d_in_pad": d_in_pad, "w_slab": w_slab}
    return slab, plan


# ----------------------------------------------------------------------------
# Wrapper: grid-free up to 1024 rows, otherwise large 128-aligned batch tiles
# sized to give an even (>= 2) number of "parallel" grid steps.
# ----------------------------------------------------------------------------
def make_critic_forward(plan, *, grid_free_max_batch=1024, max_batch_tile=2048):
    d_in_pad = plan["d_in_pad"]
    kernel = functools.partial(
        critic_fused_kernel,
        hidden_layout=plan["hidden_layout"],
        ro_w_off=plan["ro_w_off"],
        ro_b_off=plan["ro_b_off"])

    @jax.jit
    def fwd(x, slab):
        B, D = x.shape
        if D < d_in_pad:                       # no-op when input_dim is already 8-aligned
            x = jnp.pad(x, ((0, 0), (0, d_in_pad - D)))

        if B <= grid_free_max_batch:
            # [R1] Grid-free path: one invocation, everything resident in VMEM,
            # one slab DMA, one narrow (2, B) output store.
            q = pl.pallas_call(
                kernel,
                out_shape=jax.ShapeDtypeStruct((2, B), jnp.float32),
                in_specs=[pl.BlockSpec(memory_space=pltpu.MemorySpace.VMEM),
                          pl.BlockSpec(memory_space=pltpu.MemorySpace.VMEM)],
                out_specs=pl.BlockSpec(memory_space=pltpu.MemorySpace.VMEM),
            )(x, slab)
        else:
            # [R1][R2] Large tiles, multiple of 128, chosen so the grid has an
            # even number (>= 2) of steps -> both v7x TensorCores stay busy.
            pairs = pl.cdiv(B, 2 * max_batch_tile)
            tb = min(max_batch_tile, _rup(pl.cdiv(B, 2 * pairs), 128))
            # [R4] No batch padding: ragged last block handled by Pallas; the
            # garbage tail columns fall outside the (2, B) output and are dropped.
            grid = (pl.cdiv(B, tb),)
            q = pl.pallas_call(
                kernel,
                out_shape=jax.ShapeDtypeStruct((2, B), jnp.float32),
                grid=grid,
                in_specs=[
                    pl.BlockSpec((tb, d_in_pad), lambda i: (i, 0)),
                    # [R5] constant index_map -> slab fetched once, stays resident
                    # in VMEM across steps (double buffer cost ~52 KiB, negligible).
                    pl.BlockSpec(slab.shape, lambda i: (0, 0)),
                ],
                out_specs=pl.BlockSpec((2, tb), lambda i: (0, i)),
                compiler_params=pltpu.CompilerParams(
                    dimension_semantics=("parallel",)),
            )(x, slab)

        # Row 0 = q1, row 1 = q2 -> (B, 1) each, matching the PyTorch module.
        return q[0, :, None], q[1, :, None]

    return fwd


# ----------------------------------------------------------------------------
# Pure-JAX reference (same math as the PyTorch module, full f32).
# ----------------------------------------------------------------------------
def reference_forward(x, params):
    def tower(h, Ws, bs, Wr, br):
        for w, b in zip(Ws, bs):
            h = jnp.maximum(h @ w + b, 0.0)
        return h @ Wr + br
    q1 = tower(x, params["W1"], params["b1"], params["Wr1"], params["br1"])
    q2 = tower(x, params["W2"], params["b2"], params["Wr2"], params["br2"])
    return q1, q2


if __name__ == "__main__":
    # Shapes consistent with the module: obs_dim=12, act_dim=4 -> input_dim=16.
    observation_dim, action_dim = 12, 4
    hidden_dims = [32, 32]

    key = jax.random.PRNGKey(0)
    k_params, k_x1, k_x2 = jax.random.split(key, 3)
    params = init_params(k_params, observation_dim, action_dim, hidden_dims)
    slab, plan = pack_critic_params(params, observation_dim + action_dim, hidden_dims)
    fwd = make_critic_forward(plan)

    # x is the already-concatenated [observations, actions] input: (B, obs+act).
    # TODO(synk): Adam optimizer / SmoothL1Loss of the module are training-side and not part of forward.

    # Tolerances loosened for the bf16 parameter slab (f32 accumulation keeps error ~1e-3).
    ATOL, RTOL = 5e-2, 5e-2

    # Small batch -> grid-free path.
    B_small = 8
    x_small = jax.random.normal(k_x1, (B_small, observation_dim + action_dim), jnp.float32)
    q1, q2 = fwd(x_small, slab)
    jax.block_until_ready((q1, q2))
    r1, r2 = reference_forward(x_small, params)
    assert q1.shape == (B_small, 1) and q2.shape == (B_small, 1)
    assert jnp.allclose(q1, r1, atol=ATOL, rtol=RTOL), float(jnp.max(jnp.abs(q1 - r1)))
    assert jnp.allclose(q2, r2, atol=ATOL, rtol=RTOL), float(jnp.max(jnp.abs(q2 - r2)))

    # Larger, ragged batch -> batch-tiled, megacore-parallel grid path
    # (B=3000 -> tb=1536, grid=(2,), last block ragged and masked on the output).
    B_big = 3000
    x_big = jax.random.normal(k_x2, (B_big, observation_dim + action_dim), jnp.float32)
    q1b, q2b = fwd(x_big, slab)
    jax.block_until_ready((q1b, q2b))
    r1b, r2b = reference_forward(x_big, params)
    assert q1b.shape == (B_big, 1) and q2b.shape == (B_big, 1)
    assert jnp.allclose(q1b, r1b, atol=ATOL, rtol=RTOL), float(jnp.max(jnp.abs(q1b - r1b)))
    assert jnp.allclose(q2b, r2b, atol=ATOL, rtol=RTOL), float(jnp.max(jnp.abs(q2b - r2b)))

    print("KERNEL_OK")
</pallas_src>

<mosaic_0001>
module attributes {stable_mosaic.version = 11 : i64} {
  func.func @critic_fused_kernel(%arg0: memref<8x16xf32, #tpu.memory_space<vmem>>, %arg1: memref<208x128xbf16, #tpu.memory_space<vmem>>, %arg2: memref<2x8xf32, #tpu.memory_space<vmem>>) attributes {dimension_semantics = [], scalar_prefetch = 0 : i64, scratch_operands = 0 : i64, tpu.core_type = #tpu.core_type<tc>} {
    %c0 = arith.constant 0 : index
    %c0_0 = arith.constant 0 : index
    %0 = vector.load %arg0[%c0, %c0_0] : memref<8x16xf32, #tpu.memory_space<vmem>>, vector<8x16xf32>
    %c0_1 = arith.constant 0 : index
    %c0_2 = arith.constant 0 : index
    %1 = vector.load %arg1[%c0_1, %c0_2] : memref<208x128xbf16, #tpu.memory_space<vmem>>, vector<16x128xbf16>
    %c16 = arith.constant 16 : index
    %c0_3 = arith.constant 0 : index
    %2 = vector.load %arg1[%c16, %c0_3] : memref<208x128xbf16, #tpu.memory_space<vmem>>, vector<1x128xbf16>
    %3 = arith.extf %2 : vector<1x128xbf16> to vector<1x128xf32>
    %4 = arith.truncf %0 : vector<8x16xf32> to vector<8x16xbf16>
    %cst = arith.constant dense<0.000000e+00> : vector<8x128xf32>
    %5 = tpu.matmul %4, %1, %cst {dimension_numbers = #tpu.dot_dimension_numbers<[1], [0], [0], [1], [0, 0, 1, 1], [], []>} : vector<8x16xbf16>, vector<16x128xbf16>, vector<8x128xf32> -> vector<8x128xf32>
    %6 = vector.broadcast %3 : vector<1x128xf32> to vector<8x128xf32>
    %7 = arith.addf %5, %6 : vector<8x128xf32>
    %cst_4 = arith.constant 0.000000e+00 : f32
    %8 = vector.broadcast %cst_4 : f32 to vector<8x128xf32>
    %9 = arith.maximumf %7, %8 : vector<8x128xf32>
    %c32 = arith.constant 32 : index
    %c0_5 = arith.constant 0 : index
    %10 = vector.load %arg1[%c32, %c0_5] : memref<208x128xbf16, #tpu.memory_space<vmem>>, vector<128x128xbf16>
    %c160 = arith.constant 160 : index
    %c0_6 = arith.constant 0 : index
    %11 = vector.load %arg1[%c160, %c0_6] : memref<208x128xbf16, #tpu.memory_space<vmem>>, vector<1x128xbf16>
    %12 = arith.extf %11 : vector<1x128xbf16> to vector<1x128xf32>
    %13 = arith.truncf %9 : vector<8x128xf32> to vector<8x128xbf16>
    %cst_7 = arith.constant dense<0.000000e+00> : vector<8x128xf32>
    %14 = tpu.matmul %13, %10, %cst_7 {dimension_numbers = #tpu.dot_dimension_numbers<[1], [0], [0], [1], [0, 0, 1, 1], [], []>} : vector<8x128xbf16>, vector<128x128xbf16>, vector<8x128xf32> -> vector<8x128xf32>
    %15 = vector.broadcast %12 : vector<1x128xf32> to vector<8x128xf32>
    %16 = arith.addf %14, %15 : vector<8x128xf32>
    %cst_8 = arith.constant 0.000000e+00 : f32
    %17 = vector.broadcast %cst_8 : f32 to vector<8x128xf32>
    %18 = arith.maximumf %16, %17 : vector<8x128xf32>
    %c176 = arith.constant 176 : index
    %c0_9 = arith.constant 0 : index
    %19 = vector.load %arg1[%c176, %c0_9] : memref<208x128xbf16, #tpu.memory_space<vmem>>, vector<16x128xbf16>
    %c192 = arith.constant 192 : index
    %c0_10 = arith.constant 0 : index
    %20 = vector.load %arg1[%c192, %c0_10] : memref<208x128xbf16, #tpu.memory_space<vmem>>, vector<2x1xbf16>
    %21 = arith.extf %20 : vector<2x1xbf16> to vector<2x1xf32>
    %22 = arith.truncf %18 : vector<8x128xf32> to vector<8x128xbf16>
    %cst_11 = arith.constant dense<0.000000e+00> : vector<16x8xf32>
    %23 = tpu.matmul %19, %22, %cst_11 {dimension_numbers = #tpu.dot_dimension_numbers<[1], [1], [0], [0], [0, 0, 1, 0], [], []>} : vector<16x128xbf16>, vector<8x128xbf16>, vector<16x8xf32> -> vector<16x8xf32>
    %24 = vector.extract_strided_slice %23 {offsets = [0, 0], sizes = [2, 8], strides = [1, 1]} : vector<16x8xf32> to vector<2x8xf32>
    %25 = vector.broadcast %21 : vector<2x1xf32> to vector<2x8xf32>
    %26 = arith.addf %24, %25 : vector<2x8xf32>
    %c0_12 = arith.constant 0 : index
    %c0_13 = arith.constant 0 : index
    %27 = vector.load %arg2[%c0_12, %c0_13] : memref<2x8xf32, #tpu.memory_space<vmem>>, vector<2x8xf32>
    tpu.vector_store %arg2[%c0_12, %c0_13], %26 {strides = array<i32>} : memref<2x8xf32, #tpu.memory_space<vmem>>, vector<2x8xf32>,
    return
  }
}

</mosaic_0001>

<llo_original>
// kernel: fwd.1
$region0: #{fwd.1}
  #allocation0 [shape = 'u32[]', space=smem, size = 0x4, offset = 0x4, fixed_abs, tag = 'smem constant byte address 0x4 - core index']
  #allocation1 [shape = 'u32[144,128]{1,0:T(1,128)}', space=vmem, size = 0x12000, scoped, tag = 'internal scratch']
  %s0 = inlined_call_operand.hbm [shape: f32[8,16], index: 0, kind: input, shape index: {}]
  %s1 = inlined_call_operand.hbm [shape: bf16[208,128], index: 1, kind: input, shape index: {}]
  %s2 = inlined_call_operand.vmem [shape: f32[2,8], index: 2, kind: output, shape index: {}]
  %s3 = sld [smem:[#allocation0]]
  $region26: #{fwd.1} parent=0
    _
  %s5 = ssub.s32 1, %s3
  %s6 = scalar_select 0, %s5, %s3
  $region1: #{fwd.1} parent=0
    #allocation2 [shape = 'u8[4096]{0}', space=vmem, size = 0x1000, scoped, tag = 'input window, operand 0, single buffered']
    #allocation3 [shape = 's32[1]{0}', space=sflag, size = 0x4, scoped, tag = 'scoped memory for fwd.1']
    #allocation4 [shape = 'u8[53248]{0}', space=vmem, size = 0xd000, scoped, tag = 'input window, operand 1, single buffered']
    #allocation5 [shape = 's32[1]{0}', space=sflag, size = 0x4, scoped, tag = 'scoped memory for fwd.1']
    %7 = vsyncpa [#allocation3], 0
    %8 = vsyncpa [#allocation5], 0
    // Predicated region
    $region2: #{fwd.1} parent=1 // pred_check
      _
    $region3: #{fwd.1} parent=1 // pred_check_branch
      %10 = sbr.rel (0) target = $region5
    $region4: #{fwd.1} parent=1 // pred_region
      %s12 = ssub.s32 128, 128
      %13 = vsyncadd [#allocation3], %s12
      %s15 = sshll.u32 [#allocation2], 4
      %s16 = int_to_ptr.vmem [resolvable:$true] %s15
      %18 = dma.hbm_to_vmem [thread:$0]  %s0, 128, %s16, [#allocation3]
    $region5: #{fwd.1} parent=1 // pred_fallthru
      _
    // Predicated region
    $region6: #{fwd.1} parent=1 // pred_check
      _
    $region7: #{fwd.1} parent=1 // pred_check_branch
      %20 = sbr.rel (0) target = $region9
    $region8: #{fwd.1} parent=1 // pred_region
      %s22 = ssub.s32 1664, 1664
      %23 = vsyncadd [#allocation5], %s22
      %s24 = sshll.u32 [#allocation4], 4
      %s25 = int_to_ptr.vmem [resolvable:$true] %s24
      %30 = dma.hbm_to_vmem [thread:$0]  %s1, 1664, %s25, [#allocation5], 64, 64, 4
    $region9: #{fwd.1} parent=1 // pred_fallthru
      _
    // Predicated region
    $region10: #{fwd.1} parent=1 // pred_check
      _
    $region11: #{fwd.1} parent=1 // pred_check_branch
      %32 = sbr.rel (0) target = $region13
    $region12: #{fwd.1} parent=1 // pred_region
      %33 = dma.done [#allocation3], 128
    $region13: #{fwd.1} parent=1 // pred_fallthru
      _
    // Predicated region
    $region14: #{fwd.1} parent=1 // pred_check
      _
    $region15: #{fwd.1} parent=1 // pred_check_branch
      %35 = sbr.rel (0) target = $region17
    $region16: #{fwd.1} parent=1 // pred_region
      %36 = dma.done [#allocation5], 1664
    $region17: #{fwd.1} parent=1 // pred_fallthru
      _
    %v38 = vld [vmem:[#allocation2] sm:$0xff]
    %v39 = vld [vmem:[#allocation4] sm:$0xf]
    %v40 = vld [vmem:[#allocation4 + $0x4] sm:$0xf]
    %v41 = vld [vmem:[#allocation4 + $0x8] sm:$0x1]
    %v42 = vunpack.c.l.bf16 %v41
    %v43 = vpack.c.bf16 %v38, %v38
    %v44 = vlaneseq
    %v45 = vshrl.u32 %v44, 7
    %v46 = vsub.s32 0, %v45
    %v47 = vrot.slane %v42, %v46
    %v50 = vunpack.c.l.b16 %v39
    %v51 = vunpack.c.l.b16 %v40
    %v52 = vpack.c.b16 %v51, %v50
    %vm54 = vcmask 130048
    %v56 = vsel %vm54, %v43, 0
    %58 = vmatprep.subr.bf16.mxu0 0
    %59 = vmatpush1.bf16.msra.mxu0 %v52
    %60 = vmatprep.subr.bf16.mxu0 0
    %61 = vmatpush1.bf16.msra.mxu0 0
    %62 = vmatprep.subr.bf16.mxu0 0
    %63 = vmatpush1.bf16.msra.mxu0 0
    %64 = vmatprep.subr.bf16.mxu0 0
    %65 = vmatpush1.bf16.msra.mxu0 0
    %66 = vmatprep.subr.bf16.mxu0 0
    %67 = vmatpush1.bf16.msra.mxu0 0
    %68 = vmatprep.subr.bf16.mxu0 0
    %69 = vmatpush1.bf16.msra.mxu0 0
    %70 = vmatprep.subr.bf16.mxu0 0
    %71 = vmatpush1.bf16.msra.mxu0 0
    %72 = vmatprep.subr.bf16.mxu0 0
    %73 = vmatpush1.bf16.msra.mxu0 0
    %74 = vmatprep.subr.bf16.mxu0 0
    %75 = vmatpush1.bf16.msra.mxu0 0
    %76 = vmatprep.subr.bf16.mxu0 0
    %77 = vmatpush1.bf16.msra.mxu0 0
    %78 = vmatprep.subr.bf16.mxu0 0
    %79 = vmatpush1.bf16.msra.mxu0 0
    %80 = vmatprep.subr.bf16.mxu0 0
    %81 = vmatpush1.bf16.msra.mxu0 0
    %82 = vmatprep.subr.bf16.mxu0 0
    %83 = vmatpush1.bf16.msra.mxu0 0
    %84 = vmatprep.subr.bf16.mxu0 0
    %85 = vmatpush1.bf16.msra.mxu0 0
    %86 = vmatprep.subr.bf16.mxu0 0
    %87 = vmatpush1.bf16.msra.mxu0 0
    %88 = vmatprep.subr.bf16.mxu0 0
    %89 = vmatpush1.bf16.msra.mxu0 0
    %90 = vmatprep.mubr.bf16.mxu0 0
    %91 = vmatmul.mubr.bf16.gmra.mrb[0].mxu0 %v56
    %v92 = vpop.f32.mrb[0].mxu0
    %v93 = vadd.f32 %v47, %v92
    %v94 = vpop.f32.mrb[0].mxu0
    %v95 = vpop.f32.mrb[0].mxu0
    %v96 = vpop.f32.mrb[0].mxu0
    %97 = vdwg.mxu0
    %v98 = vmax.f32 %v93, 0.0
    %v99 = vld [vmem:[#allocation4 + $0x10] sm:$0xf]
    %v100 = vld [vmem:[#allocation4 + $0x14] sm:$0xf]
    %v101 = vld [vmem:[#allocation4 + $0x18] sm:$0xf]
    %v102 = vld [vmem:[#allocation4 + $0x1c] sm:$0xf]
    %v103 = vld [vmem:[#allocation4 + $0x20] sm:$0xf]
    %v104 = vld [vmem:[#allocation4 + $0x24] sm:$0xf]
    %v105 = vld [vmem:[#allocation4 + $0x28] sm:$0xf]
    %v106 = vld [vmem:[#allocation4 + $0x2c] sm:$0xf]
    %v107 = vld [vmem:[#allocation4 + $0x30] sm:$0xf]
    %v108 = vld [vmem:[#allocation4 + $0x34] sm:$0xf]
    %v109 = vld [vmem:[#allocation4 + $0x38] sm:$0xf]
    %v110 = vld [vmem:[#allocation4 + $0x3c] sm:$0xf]
    %v111 = vld [vmem:[#allocation4 + $0x40] sm:$0xf]
    %v112 = vld [vmem:[#allocation4 + $0x44] sm:$0xf]
    %v113 = vld [vmem:[#allocation4 + $0x48] sm:$0xf]
    %v114 = vld [vmem:[#allocation4 + $0x4c] sm:$0xf]
    %v115 = vld [vmem:[#allocation4 + $0x50] sm:$0x1]
    %v116 = vunpack.c.l.bf16 %v115
    %v117 = vpack.c.bf16 %v98, %v98
    %v118 = vlaneseq
    %v119 = vshrl.u32 %v118, 7
    %v120 = vsub.s32 0, %v119
    %v121 = vrot.slane %v116, %v120
    %v138 = vunpack.c.l.b16 %v99
    %v139 = vunpack.c.l.b16 %v100
    %v140 = vunpack.c.l.b16 %v101
    %v141 = vunpack.c.l.b16 %v102
    %v142 = vunpack.c.l.b16 %v103
    %v143 = vunpack.c.l.b16 %v104
    %v144 = vunpack.c.l.b16 %v105
    %v145 = vunpack.c.l.b16 %v106
    %v146 = vunpack.c.l.b16 %v107
    %v147 = vunpack.c.l.b16 %v108
    %v148 = vunpack.c.l.b16 %v109
    %v149 = vunpack.c.l.b16 %v110
    %v150 = vunpack.c.l.b16 %v111
    %v151 = vunpack.c.l.b16 %v112
    %v152 = vunpack.c.l.b16 %v113
    %v153 = vunpack.c.l.b16 %v114
    %v154 = vpack.c.b16 %v139, %v138
    %v155 = vpack.c.b16 %v141, %v140
    %v156 = vpack.c.b16 %v143, %v142
    %v157 = vpack.c.b16 %v145, %v144
    %v158 = vpack.c.b16 %v147, %v146
    %v159 = vpack.c.b16 %v149, %v148
    %v160 = vpack.c.b16 %v151, %v150
    %v161 = vpack.c.b16 %v153, %v152
    %170 = vmatprep.subr.bf16.mxu0 0
    %171 = vmatpush1.bf16.msra.mxu0 %v154
    %172 = vmatprep.subr.bf16.mxu0 0
    %173 = vmatpush1.bf16.msra.mxu0 %v155
    %174 = vmatprep.subr.bf16.mxu0 0
    %175 = vmatpush1.bf16.msra.mxu0 %v156
    %176 = vmatprep.subr.bf16.mxu0 0
    %177 = vmatpush1.bf16.msra.mxu0 %v157
    %178 = vmatprep.subr.bf16.mxu0 0
    %179 = vmatpush1.bf16.msra.mxu0 %v158
    %180 = vmatprep.subr.bf16.mxu0 0
    %181 = vmatpush1.bf16.msra.mxu0 %v159
    %182 = vmatprep.subr.bf16.mxu0 0
    %183 = vmatpush1.bf16.msra.mxu0 %v160
    %184 = vmatprep.subr.bf16.mxu0 0
    %185 = vmatpush1.bf16.msra.mxu0 %v161
    %186 = vmatprep.subr.bf16.mxu0 0
    %187 = vmatpush1.bf16.msra.mxu0 0
    %188 = vmatprep.subr.bf16.mxu0 0
    %189 = vmatpush1.bf16.msra.mxu0 0
    %190 = vmatprep.subr.bf16.mxu0 0
    %191 = vmatpush1.bf16.msra.mxu0 0
    %192 = vmatprep.subr.bf16.mxu0 0
    %193 = vmatpush1.bf16.msra.mxu0 0
    %194 = vmatprep.subr.bf16.mxu0 0
    %195 = vmatpush1.bf16.msra.mxu0 0
    %196 = vmatprep.subr.bf16.mxu0 0
    %197 = vmatpush1.bf16.msra.mxu0 0
    %198 = vmatprep.subr.bf16.mxu0 0
    %199 = vmatpush1.bf16.msra.mxu0 0
    %200 = vmatprep.subr.bf16.mxu0 0
    %201 = vmatpush1.bf16.msra.mxu0 0
    %202 = vmatprep.mubr.bf16.mxu0 0
    %203 = vmatmul.mubr.bf16.gmra.mrb[0].mxu0 %v117
    %v204 = vpop.f32.mrb[0].mxu0
    %v205 = vadd.f32 %v121, %v204
    %v206 = vpop.f32.mrb[0].mxu0
    %v207 = vpop.f32.mrb[0].mxu0
    %v208 = vpop.f32.mrb[0].mxu0
    %209 = vdwg.mxu0
    %v210 = vmax.f32 %v205, 0.0
    %v211 = vld [vmem:[#allocation4 + $0x58] sm:$0xf]
    %v212 = vld [vmem:[#allocation4 + $0x5c] sm:$0xf]
    %v213 = vld [vmem:[#allocation4 + $0x60] sm:$0x1]
    %v214 = vunpack.c.l.bf16 %v213
    %v215 = vpack.c.bf16 %v210, %v210
    %v218 = vunpack.c.l.b16 %v211
    %v219 = vunpack.c.l.b16 %v212
    %v220 = vpack.c.b16 %v219, %v218
    %222 = vmatprep.subr.bf16.mxu0 0
    %223 = vmatpush1.bf16.xpose.msra.mxu0 %v215
    %224 = vmatprep.subr.bf16.mxu0 0
    %225 = vmatpush1.bf16.xpose.msra.mxu0 0
    %226 = vmatprep.subr.bf16.mxu0 0
    %227 = vmatpush1.bf16.xpose.msra.mxu0 0
    %228 = vmatprep.subr.bf16.mxu0 0
    %229 = vmatpush1.bf16.xpose.msra.mxu0 0
    %230 = vmatprep.subr.bf16.mxu0 0
    %231 = vmatpush1.bf16.xpose.msra.mxu0 0
    %232 = vmatprep.subr.bf16.mxu0 0
    %233 = vmatpush1.bf16.xpose.msra.mxu0 0
    %234 = vmatprep.subr.bf16.mxu0 0
    %235 = vmatpush1.bf16.xpose.msra.mxu0 0
    %236 = vmatprep.subr.bf16.mxu0 0
    %237 = vmatpush1.bf16.xpose.msra.mxu0 0
    %238 = vmatprep.subr.bf16.mxu0 0
    %239 = vmatpush1.bf16.xpose.msra.mxu0 0
    %240 = vmatprep.subr.bf16.mxu0 0
    %241 = vmatpush1.bf16.xpose.msra.mxu0 0
    %242 = vmatprep.subr.bf16.mxu0 0
    %243 = vmatpush1.bf16.xpose.msra.mxu0 0
    %244 = vmatprep.subr.bf16.mxu0 0
    %245 = vmatpush1.bf16.xpose.msra.mxu0 0
    %246 = vmatprep.subr.bf16.mxu0 0
    %247 = vmatpush1.bf16.xpose.msra.mxu0 0
    %248 = vmatprep.subr.bf16.mxu0 0
    %249 = vmatpush1.bf16.xpose.msra.mxu0 0
    %250 = vmatprep.subr.bf16.mxu0 0
    %251 = vmatpush1.bf16.xpose.msra.mxu0 0
    %252 = vmatprep.subr.bf16.mxu0 0
    %253 = vmatpush1.bf16.xpose.msra.mxu0 0
    %254 = vmatprep.mubr.bf16.mxu0 0
    %255 = vmatmul.mubr.bf16.gmra.mrb[0].mxu0 %v220
    %v256 = vpop.f32.mrb[0].mxu0
    %v257 = vadd.f32 0.0, %v256
    %v258 = vpop.f32.mrb[0].mxu0
    %v259 = vpop.f32.mrb[0].mxu0
    %v260 = vpop.f32.mrb[0].mxu0
    %261 = vdwg.mxu0
    %263 = vset.pattern.permute.xlu0 0
    %264 = vperm.xlu0 %263, %v214
    %v265 = vpop.permute.xlu0 %264
    %v267 = vadd.f32 %v257, %v265
    %vm268 = vcmask 58368
    %269 = vst.msk [vmem:[%s2] sm:$0x3] %vm268, %v267
    // Predicated region
    $region18: #{fwd.1} parent=1 // pred_check
      _
    $region19: #{fwd.1} parent=1 // pred_check_branch
      %271 = sbr.rel (0) target = $region21
    $region20: #{fwd.1} parent=1 // pred_region
      _
    $region21: #{fwd.1} parent=1 // pred_fallthru
      _
    // Predicated region
    $region22: #{fwd.1} parent=1 // pred_check
      _
    $region23: #{fwd.1} parent=1 // pred_check_branch
      %273 = sbr.rel (0) target = $region25
    $region24: #{fwd.1} parent=1 // pred_region
      _
    $region25: #{fwd.1} parent=1 // pred_fallthru
      _
    %274 = vsyncpa [#allocation3], 1
    %275 = vsyncpa [#allocation5], 1

</llo_original>
